<compile_context>
chip_gen: v5e
topology: v5e:2x2
jax: 0.10.0
libtpu: 0.0.40
codegen_flags: <defaults>
</compile_context>

<pallas_src>
import functools

import jax
import jax.numpy as jnp
from jax.experimental import pallas as pl
from jax.experimental.pallas import tpu as pltpu

_LANE = 128      # lane width (last dim of a vreg)
_SUBLANE = 8     # sublane width (second-to-last dim)


def _round_up(n, m):
    return ((n + m - 1) // m) * m


def _pad_to(a, shape):
    pads = [(0, t - s) for s, t in zip(a.shape, shape)]
    if all(p == (0, 0) for p in pads):
        return a
    return jnp.pad(a, pads)


def _vmem_capacity_bytes():
    """Physical VMEM per TensorCore; conservative (v7x = 64 MiB) fallback."""
    try:
        return int(pltpu.get_tpu_info().vmem_capacity_bytes)
    except Exception:
        return 64 * 1024 * 1024


@functools.lru_cache(maxsize=None)
def _weights_single_buffer_supported():
    """One-time probe: does this jax/Mosaic accept pipeline_mode=pl.Buffered(1)
    for a grid-invariant operand AND produce correct numerics?  Probing on a
    tiny throwaway kernel means real-kernel compile errors (e.g. VMEM OOM)
    are never masked and the real kernel is built exactly once."""
    try:
        def probe(a_ref, b_ref, o_ref):
            o_ref[...] = a_ref[...] + b_ref[...]

        f = pl.pallas_call(
            probe,
            out_shape=jax.ShapeDtypeStruct((2 * _SUBLANE, _LANE), jnp.float32),
            grid_spec=pltpu.PrefetchScalarGridSpec(
                num_scalar_prefetch=0,
                grid=(2,),
                in_specs=[
                    pl.BlockSpec((_SUBLANE, _LANE), lambda i: (i, 0)),
                    pl.BlockSpec((_SUBLANE, _LANE), lambda i: (0, 0),
                                 pipeline_mode=pl.Buffered(1)),
                ],
                out_specs=pl.BlockSpec((_SUBLANE, _LANE), lambda i: (i, 0)),
            ),
            compiler_params=pltpu.CompilerParams(
                dimension_semantics=("arbitrary",)),
        )
        a = jnp.broadcast_to(
            jnp.arange(2 * _SUBLANE, dtype=jnp.float32)[:, None],
            (2 * _SUBLANE, _LANE))
        b = jnp.ones((_SUBLANE, _LANE), jnp.float32)
        out = jax.block_until_ready(f(a, b))
        return bool(jnp.allclose(out, a + 1.0))
    except Exception:
        return False


def vnetwork_kernel(x_ref, w1_ref, b1_ref, w2_ref, b2_ref, w3_ref, b3_ref,
                    o_ref):
    """Fused 3-layer MLP on one [tb, Fp] batch tile (whole net in VMEM).
    MXU operands may be bf16; accumulation, bias adds and relu stay f32
    (v5e VPU has no bf16 path)."""
    x = x_ref[...]
    # fc1 + relu
    h = jnp.dot(x.astype(w1_ref.dtype), w1_ref[...],
                preferred_element_type=jnp.float32) + b1_ref[...]
    h = jnp.maximum(h, 0.0)
    # fc2 + relu
    h = jnp.dot(h.astype(w2_ref.dtype), w2_ref[...],
                preferred_element_type=jnp.float32) + b2_ref[...]
    h = jnp.maximum(h, 0.0)
    # fc3 (no activation) -> lane-dense padded [tb, OUTp] slab
    o = jnp.dot(h.astype(w3_ref.dtype), w3_ref[...],
                preferred_element_type=jnp.float32) + b3_ref[...]
    o_ref[...] = o.astype(o_ref.dtype)


def _auto_batch_tile(batch, f_pad, out_pad, x_item, w_item, out_item,
                     single_buffer, budget):
    """Largest batch tile (multiple of 8, <= 2048 rows) whose pipelined
    buffers + in-kernel intermediates stay inside the VMEM budget."""
    # Grid-invariant weights/biases: single- or double-buffered residency.
    wb = ((2 * f_pad * f_pad + f_pad * out_pad) * w_item
          + (2 * f_pad + out_pad) * 4)
    weight_bytes = wb * (1 if single_buffer else 2)
    # Per batch row: double-buffered x tile + double-buffered out tile
    # + ~2 live (tb, Fp) f32 activations + the pre-store f32 output slab.
    per_row = (2 * f_pad * x_item + 2 * out_pad * out_item
               + 2 * f_pad * 4 + out_pad * 4)
    min_tile_bytes = _SUBLANE * per_row
    if weight_bytes + min_tile_bytes > budget:
        # TODO(synk): stream w1/w2 over their output-feature dimension with
        # pltpu.emit_pipeline instead of requiring full weight residency.
        raise ValueError(
            "Vnetwork weights need %.1f MiB resident in VMEM but the budget "
            "is %.1f MiB (padded feature dim %d); input_size too large for "
            "the fully-resident kernel."
            % (weight_bytes / 2**20, budget / 2**20, f_pad))
    avail = budget - weight_bytes
    tb = min(2048, max(_SUBLANE, (avail // per_row) // _SUBLANE * _SUBLANE))
    tb = min(tb, _round_up(batch, _SUBLANE))
    if batch > _SUBLANE:
        # >=2 grid steps enable x/out double-buffering; >=4 gives each of
        # v7x's two TensorCores >=2 pipelined iterations (cheap on 1-TC
        # v5e/v6e: per-step overhead ~0.35 us).
        target_steps = 4 if batch >= 4 * _SUBLANE else 2
        tb = min(tb, _round_up(pl.cdiv(batch, target_steps), _SUBLANE))
    return max(_SUBLANE, tb)


def vnetwork_forward(x, params, *, batch_tile=None, use_bf16_matmul=True,
                     out_dtype=jnp.float32):
    """x: [B, F] float32.  params: dict(w1,b1,w2,b2,w3,b3); wN stored
    pre-transposed as [in, out], bN as [1, out] (or [out]).
    Returns [B, out_size] in out_dtype."""
    x = jnp.asarray(x)
    B, F = x.shape
    OUT = params["w3"].shape[-1]

    w_dtype = jnp.bfloat16 if use_bf16_matmul else jnp.float32
    x_item = jnp.dtype(w_dtype).itemsize
    w_item = jnp.dtype(w_dtype).itemsize
    out_item = jnp.dtype(out_dtype).itemsize
    Fp = _round_up(max(F, _LANE), _LANE)
    OUTp = _round_up(max(OUT, _LANE), _LANE)

    # Zero-padding keeps the math exact: padded input lanes are 0, padded
    # weight rows/cols and biases are 0, relu(0)=0.
    w1 = _pad_to(jnp.asarray(params["w1"], jnp.float32), (Fp, Fp)).astype(w_dtype)
    w2 = _pad_to(jnp.asarray(params["w2"], jnp.float32), (Fp, Fp)).astype(w_dtype)
    w3 = _pad_to(jnp.asarray(params["w3"], jnp.float32), (Fp, OUTp)).astype(w_dtype)
    b1 = _pad_to(jnp.asarray(params["b1"], jnp.float32).reshape(1, -1), (1, Fp))
    b2 = _pad_to(jnp.asarray(params["b2"], jnp.float32).reshape(1, -1), (1, Fp))
    b3 = _pad_to(jnp.asarray(params["b3"], jnp.float32).reshape(1, -1), (1, OUTp))

    # Feature-probed once; real kernel is built exactly once below.
    single_buffer = _weights_single_buffer_supported()
    weight_mode = pl.Buffered(1) if single_buffer else None

    vmem_cap = _vmem_capacity_bytes()
    budget = int(vmem_cap * 0.82)        # tile heuristic budget
    vmem_limit = int(vmem_cap * 0.875)   # leave headroom for Mosaic scratch

    tb = batch_tile if batch_tile is not None else _auto_batch_tile(
        B, Fp, OUTp, x_item, w_item, out_item, single_buffer, budget)
    tb = max(_SUBLANE, _round_up(tb, _SUBLANE))
    Bp = _round_up(B, tb)                # ceil-div batch padding
    xp = _pad_to(x.astype(w_dtype), (Bp, Fp))
    grid = (Bp // tb,)

    def const_spec(shape):
        # Grid-invariant operand (index map always (0, 0)); single-buffered
        # when supported to halve its VMEM footprint.
        if weight_mode is None:
            return pl.BlockSpec(shape, lambda i: (0, 0))
        return pl.BlockSpec(shape, lambda i: (0, 0), pipeline_mode=weight_mode)

    flops = 2 * Bp * (2 * Fp * Fp + Fp * OUTp)
    bytes_accessed = (Bp * Fp * x_item + Bp * OUTp * out_item
                      + (2 * Fp * Fp + Fp * OUTp) * w_item
                      + (2 * Fp + OUTp) * 4)

    fwd = pl.pallas_call(
        vnetwork_kernel,
        out_shape=jax.ShapeDtypeStruct((Bp, OUTp), out_dtype),
        grid_spec=pltpu.PrefetchScalarGridSpec(
            num_scalar_prefetch=0,
            grid=grid,
            in_specs=[
                pl.BlockSpec((tb, Fp), lambda i: (i, 0)),   # x (batch-tiled)
                const_spec((Fp, Fp)),                        # w1
                const_spec((1, Fp)),                         # b1
                const_spec((Fp, Fp)),                        # w2
                const_spec((1, Fp)),                         # b2
                const_spec((Fp, OUTp)),                      # w3
                const_spec((1, OUTp)),                       # b3
            ],
            out_specs=pl.BlockSpec((tb, OUTp), lambda i: (i, 0)),
        ),
        compiler_params=pltpu.CompilerParams(
            dimension_semantics=("parallel",),
            vmem_limit_bytes=vmem_limit,
        ),
        cost_estimate=pl.CostEstimate(
            flops=flops, transcendentals=0, bytes_accessed=bytes_accessed),
    )
    out_padded = fwd(xp, w1, b1, w2, b2, w3, b3)
    return out_padded[:B, :OUT]


def init_params(key, input_size, output_size=2):
    """Deterministic init mimicking PyTorch's nn.Linear default
    (uniform(-1/sqrt(fan_in), 1/sqrt(fan_in))).  Weights stored as [in, out]."""
    def linear(k, fan_in, fan_out):
        kw, kb = jax.random.split(k)
        bound = 1.0 / jnp.sqrt(fan_in)
        w = jax.random.uniform(kw, (fan_in, fan_out), jnp.float32, -bound, bound)
        b = jax.random.uniform(kb, (1, fan_out), jnp.float32, -bound, bound)
        return w, b

    k1, k2, k3 = jax.random.split(key, 3)
    w1, b1 = linear(k1, input_size, input_size)
    w2, b2 = linear(k2, input_size, input_size)
    w3, b3 = linear(k3, input_size, output_size)
    return dict(w1=w1, b1=b1, w2=w2, b2=b2, w3=w3, b3=b3)


def vnetwork_reference(x, p, matmul_dtype=jnp.float32):
    """Pure-JAX reference of the PyTorch forward.  matmul_dtype=bfloat16
    mirrors the kernel's bf16-operand / f32-accumulate path."""
    def mm(a, w):
        return jnp.dot(a.astype(matmul_dtype), w.astype(matmul_dtype),
                       preferred_element_type=jnp.float32)
    h = jax.nn.relu(mm(x, p["w1"]) + p["b1"])
    h = jax.nn.relu(mm(h, p["w2"]) + p["b2"])
    return mm(h, p["w3"]) + p["b3"]


if __name__ == "__main__":
    key = jax.random.PRNGKey(0)
    kx, kp, kx2 = jax.random.split(key, 3)

    B, F, OUT = 8, 32, 2
    x = jax.random.normal(kx, (B, F), jnp.float32)
    params = init_params(kp, F, OUT)

    # Default path: bf16 MXU operands, f32 accumulation.
    out = jax.block_until_ready(vnetwork_forward(x, params))
    ref_bf16 = vnetwork_reference(x, params, matmul_dtype=jnp.bfloat16)
    assert out.shape == (B, OUT), out.shape
    assert jnp.allclose(out, ref_bf16, atol=5e-4, rtol=5e-4), \
        f"bf16 max abs err = {float(jnp.max(jnp.abs(out - ref_bf16)))}"

    # f32 MXU path: matches the PyTorch f32 math tightly.
    out_f32 = jax.block_until_ready(
        vnetwork_forward(x, params, use_bf16_matmul=False))
    ref_f32 = vnetwork_reference(x, params)
    assert jnp.allclose(out_f32, ref_f32, atol=1e-5, rtol=1e-5), \
        f"f32 max abs err = {float(jnp.max(jnp.abs(out_f32 - ref_f32)))}"

    # Ragged batch: exercises ceil-div padding and a multi-step (pipelined,
    # megacore-shardable) grid.
    x2 = jax.random.normal(kx2, (13, F), jnp.float32)
    out2 = jax.block_until_ready(vnetwork_forward(x2, params))
    ref2 = vnetwork_reference(x2, params, matmul_dtype=jnp.bfloat16)
    assert out2.shape == (13, OUT), out2.shape
    assert jnp.allclose(out2, ref2, atol=5e-4, rtol=5e-4), \
        f"bf16 ragged max abs err = {float(jnp.max(jnp.abs(out2 - ref2)))}"

    print("KERNEL_OK")
</pallas_src>

<mosaic_0001>
module attributes {stable_mosaic.version = 11 : i64} {
  func.func @probe(%arg0: i32, %arg1: memref<8x128xf32, #tpu.memory_space<vmem>>, %arg2: memref<8x128xf32, #tpu.memory_space<vmem>>, %arg3: memref<8x128xf32, #tpu.memory_space<vmem>>) attributes {dimension_semantics = [#tpu.dimension_semantics<arbitrary>], iteration_bounds = array<i64: 2>, scalar_prefetch = 0 : i64, scratch_operands = 0 : i64, tpu.core_type = #tpu.core_type<tc>, window_params = [{transform_indices = @transform_0, window_bounds = array<i64: 8, 128>}, {pipeline_mode = #tpu.pipeline_mode<synchronous>, transform_indices = @transform_1, window_bounds = array<i64: 8, 128>}, {transform_indices = @transform_2, window_bounds = array<i64: 8, 128>}]} {
    %c0 = arith.constant 0 : index
    %c0_0 = arith.constant 0 : index
    %0 = vector.load %arg1[%c0, %c0_0] : memref<8x128xf32, #tpu.memory_space<vmem>>, vector<8x128xf32>
    %c0_1 = arith.constant 0 : index
    %c0_2 = arith.constant 0 : index
    %1 = vector.load %arg2[%c0_1, %c0_2] : memref<8x128xf32, #tpu.memory_space<vmem>>, vector<8x128xf32>
    %2 = arith.addf %0, %1 : vector<8x128xf32>
    %c0_3 = arith.constant 0 : index
    %c0_4 = arith.constant 0 : index
    %3 = vector.load %arg3[%c0_3, %c0_4] : memref<8x128xf32, #tpu.memory_space<vmem>>, vector<8x128xf32>
    tpu.vector_store %arg3[%c0_3, %c0_4], %2 {strides = array<i32>} : memref<8x128xf32, #tpu.memory_space<vmem>>, vector<8x128xf32>,
    return
  }
  func.func @transform_0(%arg0: i32) -> (i32, i32) {
    %c0_i32 = arith.constant 0 : i32
    %c0_i32_0 = arith.constant 0 : i32
    return %arg0, %c0_i32 : i32, i32
  }
  func.func @transform_1(%arg0: i32) -> (i32, i32) {
    %c0_i32 = arith.constant 0 : i32
    %c0_i32_0 = arith.constant 0 : i32
    %c0_i32_1 = arith.constant 0 : i32
    return %c0_i32, %c0_i32_0 : i32, i32
  }
  func.func @transform_2(%arg0: i32) -> (i32, i32) {
    %c0_i32 = arith.constant 0 : i32
    %c0_i32_0 = arith.constant 0 : i32
    return %arg0, %c0_i32 : i32, i32
  }
}

module attributes {stable_mosaic.version = 11 : i64} {
  func.func @vnetwork_kernel(%arg0: i32, %arg1: memref<8x128xbf16, #tpu.memory_space<vmem>>, %arg2: memref<128x128xbf16, #tpu.memory_space<vmem>>, %arg3: memref<1x128xf32, #tpu.memory_space<vmem>>, %arg4: memref<128x128xbf16, #tpu.memory_space<vmem>>, %arg5: memref<1x128xf32, #tpu.memory_space<vmem>>, %arg6: memref<128x128xbf16, #tpu.memory_space<vmem>>, %arg7: memref<1x128xf32, #tpu.memory_space<vmem>>, %arg8: memref<8x128xf32, #tpu.memory_space<vmem>>) attributes {dimension_semantics = [#tpu.dimension_semantics<parallel>], iteration_bounds = array<i64: 1>, scalar_prefetch = 0 : i64, scratch_operands = 0 : i64, tpu.core_type = #tpu.core_type<tc>, window_params = [{transform_indices = @transform_0, window_bounds = array<i64: 8, 128>}, {pipeline_mode = #tpu.pipeline_mode<synchronous>, transform_indices = @transform_1, window_bounds = array<i64: 128, 128>}, {pipeline_mode = #tpu.pipeline_mode<synchronous>, transform_indices = @transform_2, window_bounds = array<i64: 1, 128>}, {pipeline_mode = #tpu.pipeline_mode<synchronous>, transform_indices = @transform_3, window_bounds = array<i64: 128, 128>}, {pipeline_mode = #tpu.pipeline_mode<synchronous>, transform_indices = @transform_4, window_bounds = array<i64: 1, 128>}, {pipeline_mode = #tpu.pipeline_mode<synchronous>, transform_indices = @transform_5, window_bounds = array<i64: 128, 128>}, {pipeline_mode = #tpu.pipeline_mode<synchronous>, transform_indices = @transform_6, window_bounds = array<i64: 1, 128>}, {transform_indices = @transform_7, window_bounds = array<i64: 8, 128>}]} {
    %c0 = arith.constant 0 : index
    %c0_0 = arith.constant 0 : index
    %0 = vector.load %arg1[%c0, %c0_0] : memref<8x128xbf16, #tpu.memory_space<vmem>>, vector<8x128xbf16>
    %c0_1 = arith.constant 0 : index
    %c0_2 = arith.constant 0 : index
    %1 = vector.load %arg2[%c0_1, %c0_2] : memref<128x128xbf16, #tpu.memory_space<vmem>>, vector<128x128xbf16>
    %cst = arith.constant dense<0.000000e+00> : vector<8x128xf32>
    %2 = tpu.matmul %0, %1, %cst {dimension_numbers = #tpu.dot_dimension_numbers<[1], [0], [0], [1], [0, 0, 1, 1], [], []>} : vector<8x128xbf16>, vector<128x128xbf16>, vector<8x128xf32> -> vector<8x128xf32>
    %c0_3 = arith.constant 0 : index
    %c0_4 = arith.constant 0 : index
    %3 = vector.load %arg3[%c0_3, %c0_4] : memref<1x128xf32, #tpu.memory_space<vmem>>, vector<1x128xf32>
    %4 = vector.broadcast %3 : vector<1x128xf32> to vector<8x128xf32>
    %5 = arith.addf %2, %4 : vector<8x128xf32>
    %cst_5 = arith.constant 0.000000e+00 : f32
    %6 = vector.broadcast %cst_5 : f32 to vector<8x128xf32>
    %7 = arith.maximumf %5, %6 : vector<8x128xf32>
    %8 = arith.truncf %7 : vector<8x128xf32> to vector<8x128xbf16>
    %c0_6 = arith.constant 0 : index
    %c0_7 = arith.constant 0 : index
    %9 = vector.load %arg4[%c0_6, %c0_7] : memref<128x128xbf16, #tpu.memory_space<vmem>>, vector<128x128xbf16>
    %cst_8 = arith.constant dense<0.000000e+00> : vector<8x128xf32>
    %10 = tpu.matmul %8, %9, %cst_8 {dimension_numbers = #tpu.dot_dimension_numbers<[1], [0], [0], [1], [0, 0, 1, 1], [], []>} : vector<8x128xbf16>, vector<128x128xbf16>, vector<8x128xf32> -> vector<8x128xf32>
    %c0_9 = arith.constant 0 : index
    %c0_10 = arith.constant 0 : index
    %11 = vector.load %arg5[%c0_9, %c0_10] : memref<1x128xf32, #tpu.memory_space<vmem>>, vector<1x128xf32>
    %12 = vector.broadcast %11 : vector<1x128xf32> to vector<8x128xf32>
    %13 = arith.addf %10, %12 : vector<8x128xf32>
    %cst_11 = arith.constant 0.000000e+00 : f32
    %14 = vector.broadcast %cst_11 : f32 to vector<8x128xf32>
    %15 = arith.maximumf %13, %14 : vector<8x128xf32>
    %16 = arith.truncf %15 : vector<8x128xf32> to vector<8x128xbf16>
    %c0_12 = arith.constant 0 : index
    %c0_13 = arith.constant 0 : index
    %17 = vector.load %arg6[%c0_12, %c0_13] : memref<128x128xbf16, #tpu.memory_space<vmem>>, vector<128x128xbf16>
    %cst_14 = arith.constant dense<0.000000e+00> : vector<8x128xf32>
    %18 = tpu.matmul %16, %17, %cst_14 {dimension_numbers = #tpu.dot_dimension_numbers<[1], [0], [0], [1], [0, 0, 1, 1], [], []>} : vector<8x128xbf16>, vector<128x128xbf16>, vector<8x128xf32> -> vector<8x128xf32>
    %c0_15 = arith.constant 0 : index
    %c0_16 = arith.constant 0 : index
    %19 = vector.load %arg7[%c0_15, %c0_16] : memref<1x128xf32, #tpu.memory_space<vmem>>, vector<1x128xf32>
    %20 = vector.broadcast %19 : vector<1x128xf32> to vector<8x128xf32>
    %21 = arith.addf %18, %20 : vector<8x128xf32>
    %c0_17 = arith.constant 0 : index
    %c0_18 = arith.constant 0 : index
    %22 = vector.load %arg8[%c0_17, %c0_18] : memref<8x128xf32, #tpu.memory_space<vmem>>, vector<8x128xf32>
    tpu.vector_store %arg8[%c0_17, %c0_18], %21 {strides = array<i32>} : memref<8x128xf32, #tpu.memory_space<vmem>>, vector<8x128xf32>,
    return
  }
  func.func @transform_0(%arg0: i32) -> (i32, i32) {
    %c0_i32 = arith.constant 0 : i32
    %c0_i32_0 = arith.constant 0 : i32
    return %arg0, %c0_i32 : i32, i32
  }
  func.func @transform_1(%arg0: i32) -> (i32, i32) {
    %c0_i32 = arith.constant 0 : i32
    %c0_i32_0 = arith.constant 0 : i32
    %c0_i32_1 = arith.constant 0 : i32
    return %c0_i32, %c0_i32_0 : i32, i32
  }
  func.func @transform_2(%arg0: i32) -> (i32, i32) {
    %c0_i32 = arith.constant 0 : i32
    %c0_i32_0 = arith.constant 0 : i32
    %c0_i32_1 = arith.constant 0 : i32
    return %c0_i32, %c0_i32_0 : i32, i32
  }
  func.func @transform_3(%arg0: i32) -> (i32, i32) {
    %c0_i32 = arith.constant 0 : i32
    %c0_i32_0 = arith.constant 0 : i32
    %c0_i32_1 = arith.constant 0 : i32
    return %c0_i32, %c0_i32_0 : i32, i32
  }
  func.func @transform_4(%arg0: i32) -> (i32, i32) {
    %c0_i32 = arith.constant 0 : i32
    %c0_i32_0 = arith.constant 0 : i32
    %c0_i32_1 = arith.constant 0 : i32
    return %c0_i32, %c0_i32_0 : i32, i32
  }
  func.func @transform_5(%arg0: i32) -> (i32, i32) {
    %c0_i32 = arith.constant 0 : i32
    %c0_i32_0 = arith.constant 0 : i32
    %c0_i32_1 = arith.constant 0 : i32
    return %c0_i32, %c0_i32_0 : i32, i32
  }
  func.func @transform_6(%arg0: i32) -> (i32, i32) {
    %c0_i32 = arith.constant 0 : i32
    %c0_i32_0 = arith.constant 0 : i32
    %c0_i32_1 = arith.constant 0 : i32
    return %c0_i32, %c0_i32_0 : i32, i32
  }
  func.func @transform_7(%arg0: i32) -> (i32, i32) {
    %c0_i32 = arith.constant 0 : i32
    %c0_i32_0 = arith.constant 0 : i32
    return %arg0, %c0_i32 : i32, i32
  }
}

</mosaic_0001>

<llo_original>
// kernel: tpu_custom_call.1
$region0: #{tpu_custom_call.1}
  #allocation0 [shape = 'u32[]', space=smem, size = 0x4, offset = 0x4, fixed_abs, tag = 'smem constant byte address 0x4 - core index']
  #allocation1 [shape = 'u32[72,128]{1,0:T(1,128)}', space=vmem, size = 0x9000, scoped, tag = 'internal scratch']
  %s0 = inlined_call_operand.hbm [shape: f32[16,128], index: 0, kind: input, shape index: {}]
  %s1 = inlined_call_operand.hbm [shape: f32[8,128], index: 1, kind: input, shape index: {}]
  %s2 = inlined_call_operand.hbm [shape: f32[16,128], index: 2, kind: output, shape index: {}]
  %s3 = sld [smem:[#allocation0]]
  $region49: #{tpu_custom_call.1} parent=0
    _
  %s5 = ssub.s32 1, %s3
  %s6 = scalar_select 0, %s5, %s3
  $region1: #{tpu_custom_call.1} parent=0
    #allocation2 [shape = 'u8[8192]{0}', space=vmem, size = 0x2000, scoped, tag = 'input window, operand 0']
    #allocation3 [shape = 's32[2]{0}', space=sflag, size = 0x8, scoped, tag = 'scoped memory for tpu_custom_call.1']
    #allocation4 [shape = 's32[2]{0}', space=sflag, size = 0x8, scoped, tag = 'scoped memory for tpu_custom_call.1']
    #allocation5 [shape = 'u8[4096]{0}', space=vmem, size = 0x1000, scoped, tag = 'input window, operand 1, single buffered']
    #allocation6 [shape = 's32[1]{0}', space=sflag, size = 0x4, scoped, tag = 'scoped memory for tpu_custom_call.1']
    #allocation7 [shape = 'u8[8192]{0}', space=vmem, size = 0x2000, scoped, tag = 'output window, operand 0']
    %7 = vsyncpa [#allocation3], 0
    %s8 = scalar_lea.sflag [#allocation3], 1
    %9 = vsyncpa %s8, 0
    %10 = vsyncpa [#allocation6], 0
    %11 = vsyncpa [#allocation4], 0
    %s12 = scalar_lea.sflag [#allocation4], 1
    %13 = vsyncpa %s12, 0
    loop: start=0, step=1, limit=4
    $region2: #{tpu_custom_call.1} parent=1 // loop_pre_header
      _
    $region3: #{tpu_custom_call.1} parent=1 // loop_header
      %s15 = sphi 0, %s19
      %p16 = scmp.ge.s32.totalorder %s15, 4
      %s25 = sphi 0, %s27
      %s28 = sphi 0, %s25
      %s29 = sphi 0, %s28
      %s45 = sphi 0, %s29
      %s49 = sphi 0, %s49
      %s51 = sphi 0, %s49
      %s52 = sphi 0, %s51
      %s66 = sphi 0, %s52
      %s72 = sphi 0, %s74
      %s75 = sphi 0, %s72
      %s76 = sphi 0, %s75
      %s92 = sphi 0, %s76
    $region4: #{tpu_custom_call.1} parent=1 // loop_header_branch
      %18 = sbr.rel (%p16) target = $region8
    $region5: #{tpu_custom_call.1} parent=1 // loop_body
      %s20 = ssub.s32 %s15, 1
      %s21 = ssub.s32 %s15, 2
      %s22 = sadd.s32 %s15, 1
      %s23 = ssub.s32 %s15, %s22
      %p24 = scmp.eq.s32.totalorder %s23, 0
      %s26 = sadd.s32 %s25, 1
      %s27 = scalar_select %p24, %s25, %s26
      %p30 = pneg %p24
      %p31 = scmp.eq.s32.totalorder %s15, 1
      %p32 = por %p30, %p31
      %p33 = scmp.ne.s32.totalorder %s25, %s28
      %p34 = scmp.eq.s32.totalorder %s15, 0
      %p35 = por %p33, %p34
      %p36 = scmp.ne.s32.totalorder %s25, %s28
      %p37 = scmp.eq.s32.totalorder %s20, 1
      %p38 = por %p36, %p37
      %p39 = scmp.ne.s32.totalorder %s28, %s29
      %p40 = scmp.eq.s32.totalorder %s20, 0
      %p41 = por %p39, %p40
      %p42 = scmp.ne.s32.totalorder %s28, %s29
      %p43 = scmp.eq.s32.totalorder %s21, 1
      %p44 = por %p42, %p43
      %p46 = scmp.ne.s32.totalorder %s29, %s45
      %p47 = scmp.eq.s32.totalorder %s21, 0
      %p48 = por %p46, %p47
      %s50 = sadd.s32 %s49, 1
      %p53 = scmp.eq.s32.totalorder %s15, 1
      %p54 = scmp.ne.s32.totalorder %s49, %s51
      %p55 = scmp.eq.s32.totalorder %s15, 0
      %p56 = por %p54, %p55
      %p57 = scmp.ne.s32.totalorder %s49, %s51
      %p58 = scmp.eq.s32.totalorder %s20, 1
      %p59 = por %p57, %p58
      %p60 = scmp.ne.s32.totalorder %s51, %s52
      %p61 = scmp.eq.s32.totalorder %s20, 0
      %p62 = por %p60, %p61
      %p63 = scmp.ne.s32.totalorder %s51, %s52
      %p64 = scmp.eq.s32.totalorder %s21, 1
      %p65 = por %p63, %p64
      %p67 = scmp.ne.s32.totalorder %s52, %s66
      %p68 = scmp.eq.s32.totalorder %s21, 0
      %p69 = por %p67, %p68
      %s70 = ssub.s32 %s15, %s22
      %p71 = scmp.eq.s32.totalorder %s70, 0
      %s73 = sadd.s32 %s72, 1
      %s74 = scalar_select %p71, %s72, %s73
      %p77 = pneg %p71
      %p78 = scmp.eq.s32.totalorder %s15, 1
      %p79 = por %p77, %p78
      %p80 = scmp.ne.s32.totalorder %s72, %s75
      %p81 = scmp.eq.s32.totalorder %s15, 0
      %p82 = por %p80, %p81
      %p83 = scmp.ne.s32.totalorder %s72, %s75
      %p84 = scmp.eq.s32.totalorder %s20, 1
      %p85 = por %p83, %p84
      %p86 = scmp.ne.s32.totalorder %s75, %s76
      %p87 = scmp.eq.s32.totalorder %s20, 0
      %p88 = por %p86, %p87
      %p89 = scmp.ne.s32.totalorder %s75, %s76
      %p90 = scmp.eq.s32.totalorder %s21, 1
      %p91 = por %p89, %p90
      %p93 = scmp.ne.s32.totalorder %s76, %s92
      %p94 = scmp.eq.s32.totalorder %s21, 0
      %p95 = por %p93, %p94
      %p96 = scmp.le.s32.totalorder 1, %s15
      %p97 = scmp.lt.s32.totalorder %s15, 3
      %p98 = pnand %p96, %p97
      %p99 = pneg %p98
      // Predicated region
      $region9: #{tpu_custom_call.1} parent=5 // pred_check
        _
      $region10: #{tpu_custom_call.1} parent=5 // pred_check_branch
        %101 = sbr.rel (%p98) target = $region12
      $region11: #{tpu_custom_call.1} parent=5 // pred_region
        %s102 = ssub.s32 %s15, 1
        // Predicated region
        $region13: #{tpu_custom_call.1} parent=11 // pred_check
          %p103 = pneg %p62
        $region14: #{tpu_custom_call.1} parent=11 // pred_check_branch
          %105 = sbr.rel (%p103) target = $region16
        $region15: #{tpu_custom_call.1} parent=11 // pred_region
          %107 = vsyncadd [#allocation6], 0
          %s109 = sshll.u32 %s1, 4
          %s110 = int_to_ptr.hbm [resolvable:$true] %s109
          %s111 = sshll.u32 [#allocation5], 4
          %s112 = int_to_ptr.vmem [resolvable:$true] %s111
          %114 = dma.hbm_to_vmem [thread:$0]  %s110, 128, %s112, [#allocation6]
        $region16: #{tpu_custom_call.1} parent=11 // pred_fallthru
          _
      $region12: #{tpu_custom_call.1} parent=5 // pred_fallthru
        _
      %p115 = scmp.lt.s32.totalorder %s15, 2
      // Predicated region
      $region17: #{tpu_custom_call.1} parent=5 // pred_check
        %p116 = pneg %p115
      $region18: #{tpu_custom_call.1} parent=5 // pred_check_branch
        %118 = sbr.rel (%p116) target = $region20
      $region19: #{tpu_custom_call.1} parent=5 // pred_region
        // Predicated region
        $region21: #{tpu_custom_call.1} parent=19 // pred_check
          %p119 = pneg %p35
        $region22: #{tpu_custom_call.1} parent=19 // pred_check_branch
          %121 = sbr.rel (%p119) target = $region24
        $region23: #{tpu_custom_call.1} parent=19 // pred_region
          %s122 = sand.u32 %s25, 1
          %s123 = scalar_lea.sflag [#allocation3], %s122
          %s124 = sand.u32 %s25, 1
          %s125 = smul.addr %s124, 8
          %s126 = scalar_lea.vmem [#allocation2], %s125
          %128 = vsyncadd %s123, 0
          %s129 = smul.addr %s15, 8
          %s130 = scalar_lea.hbm %s0, %s129
          %s132 = sshll.u32 %s130, 4
          %s133 = int_to_ptr.hbm [resolvable:$true] %s132
          %s134 = sshll.u32 %s126, 4
          %s135 = int_to_ptr.vmem [resolvable:$true] %s134
          %137 = dma.hbm_to_vmem [thread:$0]  %s133, 128, %s135, %s123
        $region24: #{tpu_custom_call.1} parent=19 // pred_fallthru
          _
      $region20: #{tpu_custom_call.1} parent=5 // pred_fallthru
        _
      %p138 = scmp.le.s32.totalorder 1, %s15
      %p139 = scmp.lt.s32.totalorder %s15, 3
      %p140 = pnand %p138, %p139
      %p141 = pneg %p140
      // Predicated region
      $region25: #{tpu_custom_call.1} parent=5 // pred_check
        _
      $region26: #{tpu_custom_call.1} parent=5 // pred_check_branch
        %143 = sbr.rel (%p140) target = $region28
      $region27: #{tpu_custom_call.1} parent=5 // pred_region
        %s144 = ssub.s32 %s15, 1
        %s145 = sand.u32 %s28, 1
        %s146 = scalar_lea.sflag [#allocation3], %s145
        %s147 = sand.u32 %s28, 1
        %s148 = smul.addr %s147, 8
        %s149 = scalar_lea.vmem [#allocation2], %s148
        // Predicated region
        $region29: #{tpu_custom_call.1} parent=27 // pred_check
          %p150 = pneg %p41
        $region30: #{tpu_custom_call.1} parent=27 // pred_check_branch
          %152 = sbr.rel (%p150) target = $region32
        $region31: #{tpu_custom_call.1} parent=27 // pred_region
          %154 = dma.done %s146, 128
        $region32: #{tpu_custom_call.1} parent=27 // pred_fallthru
          _
        // Predicated region
        $region33: #{tpu_custom_call.1} parent=27 // pred_check
          %p155 = pneg %p62
        $region34: #{tpu_custom_call.1} parent=27 // pred_check_branch
          %157 = sbr.rel (%p155) target = $region36
        $region35: #{tpu_custom_call.1} parent=27 // pred_region
          %159 = dma.done [#allocation6], 128
        $region36: #{tpu_custom_call.1} parent=27 // pred_fallthru
          _
        %s160 = sand.u32 %s28, 1
        %s161 = scalar_lea.sflag [#allocation3], %s160
        %s162 = sand.u32 %s28, 1
        %s163 = smul.addr %s162, 8
        %s164 = scalar_lea.vmem [#allocation2], %s163
        %p165 = pneg %p41
        %p166 = pneg %p38
        %p167 = pneg %p62
        %p168 = pneg %p59
        %p169 = pneg %p88
        %p170 = pneg %p85
        %s171 = sand.u32 %s75, 1
        %s172 = scalar_lea.sflag [#allocation4], %s171
        %s173 = sand.u32 %s75, 1
        %s174 = smul.addr %s173, 8
        %s175 = scalar_lea.vmem [#allocation7], %s174
        %v176 = vld [vmem:[%s149] sm:$0xff]
        %v177 = vld [vmem:[#allocation5] sm:$0xff]
        %v178 = vadd.f32 %v176, %v177
        %179 = vst [vmem:[%s175] sm:$0xff] %v178
        %s180 = sand.u32 %s75, 1
        %s181 = scalar_lea.sflag [#allocation4], %s180
        %s182 = sand.u32 %s75, 1
        %s183 = smul.addr %s182, 8
        %s184 = scalar_lea.vmem [#allocation7], %s183
        // Predicated region
        $region37: #{tpu_custom_call.1} parent=27 // pred_check
          %p185 = pneg %p85
        $region38: #{tpu_custom_call.1} parent=27 // pred_check_branch
          %187 = sbr.rel (%p185) target = $region40
        $region39: #{tpu_custom_call.1} parent=27 // pred_region
          %189 = vsyncadd %s181, 0
          %s190 = smul.addr %s20, 8
          %s191 = scalar_lea.hbm %s2, %s190
          %s193 = sshll.u32 %s184, 4
          %s194 = int_to_ptr.vmem [resolvable:$true] %s193
          %s195 = sshll.u32 %s191, 4
          %s196 = int_to_ptr.hbm [resolvable:$true] %s195
          %198 = dma.vmem_to_hbm [thread:$0]  %s194, 128, %s196, %s181
        $region40: #{tpu_custom_call.1} parent=27 // pred_fallthru
          _
      $region28: #{tpu_custom_call.1} parent=5 // pred_fallthru
        _
      %p199 = scmp.le.s32.totalorder 2, %s15
      // Predicated region
      $region41: #{tpu_custom_call.1} parent=5 // pred_check
        %p200 = pneg %p199
      $region42: #{tpu_custom_call.1} parent=5 // pred_check_branch
        %202 = sbr.rel (%p200) target = $region44
      $region43: #{tpu_custom_call.1} parent=5 // pred_region
        %s203 = ssub.s32 %s15, 2
        // Predicated region
        $region45: #{tpu_custom_call.1} parent=43 // pred_check
          %p204 = pneg %p91
        $region46: #{tpu_custom_call.1} parent=43 // pred_check_branch
          %206 = sbr.rel (%p204) target = $region48
        $region47: #{tpu_custom_call.1} parent=43 // pred_region
          %s207 = sand.u32 %s76, 1
          %s208 = scalar_lea.sflag [#allocation4], %s207
          %s209 = sand.u32 %s76, 1
          %s210 = smul.addr %s209, 8
          %s211 = scalar_lea.vmem [#allocation7], %s210
          %213 = dma.done %s208, 128
        $region48: #{tpu_custom_call.1} parent=43 // pred_fallthru
          _
      $region44: #{tpu_custom_call.1} parent=5 // pred_fallthru
        _
    $region6: #{tpu_custom_call.1} parent=1 // loop_footer
      %s19 = sadd.s32 1, %s15
    $region7: #{tpu_custom_call.1} parent=1 // loop_footer_branch
      %14 = sbr.rel target = $region3
    $region8: #{tpu_custom_call.1} parent=1 // loop_exit
      _
    %214 = vsyncpa [#allocation3], 1
    %s215 = scalar_lea.sflag [#allocation3], 1
    %216 = vsyncpa %s215, 1
    %217 = vsyncpa [#allocation6], 1
    %218 = vsyncpa [#allocation4], 1
    %s219 = scalar_lea.sflag [#allocation4], 1
    %220 = vsyncpa %s219, 1

// kernel: tpu_custom_call.1
$region0: #{tpu_custom_call.1}
  #allocation0 [shape = 'u32[]', space=smem, size = 0x4, offset = 0x4, fixed_abs, tag = 'smem constant byte address 0x4 - core index']
  #allocation1 [shape = 'u32[72,128]{1,0:T(1,128)}', space=vmem, size = 0x9000, scoped, tag = 'internal scratch']
  %s0 = inlined_call_operand.hbm [shape: bf16[8,128], index: 0, kind: input, shape index: {}]
  %s1 = inlined_call_operand.hbm [shape: bf16[128,128], index: 1, kind: input, shape index: {}]
  %s2 = inlined_call_operand.vmem [shape: f32[1,128], index: 2, kind: input, shape index: {}]
  %s3 = inlined_call_operand.hbm [shape: bf16[128,128], index: 3, kind: input, shape index: {}]
  %s4 = inlined_call_operand.vmem [shape: f32[1,128], index: 4, kind: input, shape index: {}]
  %s5 = inlined_call_operand.hbm [shape: bf16[128,128], index: 5, kind: input, shape index: {}]
  %s6 = inlined_call_operand.vmem [shape: f32[1,128], index: 6, kind: input, shape index: {}]
  %s7 = inlined_call_operand.hbm [shape: f32[8,128], index: 7, kind: output, shape index: {}]
  %s8 = sld [smem:[#allocation0]]
  $region54: #{tpu_custom_call.1} parent=0
    _
  %s10 = ssub.s32 1, %s8
  %s11 = scalar_select 0, %s10, %s8
  $region1: #{tpu_custom_call.1} parent=0
    #allocation2 [shape = 'u8[2048]{0}', space=vmem, size = 0x800, scoped, tag = 'input window, operand 0, single buffered']
    #allocation3 [shape = 's32[1]{0}', space=sflag, size = 0x4, scoped, tag = 'scoped memory for tpu_custom_call.1']
    #allocation4 [shape = 's32[1]{0}', space=sflag, size = 0x4, scoped, tag = 'scoped memory for tpu_custom_call.1']
    #allocation5 [shape = 'u8[32768]{0}', space=vmem, size = 0x8000, scoped, tag = 'input window, operand 1, single buffered']
    #allocation6 [shape = 's32[1]{0}', space=sflag, size = 0x4, scoped, tag = 'scoped memory for tpu_custom_call.1']
    #allocation7 [shape = 'u8[32768]{0}', space=vmem, size = 0x8000, scoped, tag = 'input window, operand 3, single buffered']
    #allocation8 [shape = 'u8[32768]{0}', space=vmem, size = 0x8000, scoped, tag = 'input window, operand 5, single buffered']
    #allocation9 [shape = 's32[1]{0}', space=sflag, size = 0x4, scoped, tag = 'scoped memory for tpu_custom_call.1']
    #allocation10 [shape = 'u8[4096]{0}', space=vmem, size = 0x1000, scoped, tag = 'output window, operand 0, single buffered']
    %12 = vsyncpa [#allocation3], 0
    %13 = vsyncpa [#allocation6], 0
    %14 = vsyncpa [#allocation9], 0
    %15 = vsyncpa [#allocation4], 0
    // Predicated region
    $region2: #{tpu_custom_call.1} parent=1 // pred_check
      _
    $region3: #{tpu_custom_call.1} parent=1 // pred_check_branch
      %17 = sbr.rel (0) target = $region5
    $region4: #{tpu_custom_call.1} parent=1 // pred_region
      %19 = vsyncadd [#allocation3], 0
      %s21 = sshll.u32 %s0, 4
      %s22 = int_to_ptr.hbm [resolvable:$true] %s21
      %s23 = sshll.u32 [#allocation2], 4
      %s24 = int_to_ptr.vmem [resolvable:$true] %s23
      %26 = dma.hbm_to_vmem [thread:$0]  %s22, 64, %s24, [#allocation3]
    $region5: #{tpu_custom_call.1} parent=1 // pred_fallthru
      _
    // Predicated region
    $region6: #{tpu_custom_call.1} parent=1 // pred_check
      _
    $region7: #{tpu_custom_call.1} parent=1 // pred_check_branch
      %28 = sbr.rel (0) target = $region9
    $region8: #{tpu_custom_call.1} parent=1 // pred_region
      %30 = vsyncadd [#allocation6], 0
      %s31 = sshll.u32 %s1, 4
      %s32 = int_to_ptr.hbm [resolvable:$true] %s31
      %s33 = sshll.u32 [#allocation5], 4
      %s34 = int_to_ptr.vmem [resolvable:$true] %s33
      %39 = dma.hbm_to_vmem [thread:$0]  %s32, 1024, %s34, [#allocation6], 64, 64, 4
    $region9: #{tpu_custom_call.1} parent=1 // pred_fallthru
      _
    // Predicated region
    $region10: #{tpu_custom_call.1} parent=1 // pred_check
      _
    $region11: #{tpu_custom_call.1} parent=1 // pred_check_branch
      %41 = sbr.rel (0) target = $region13
    $region12: #{tpu_custom_call.1} parent=1 // pred_region
      _
    $region13: #{tpu_custom_call.1} parent=1 // pred_fallthru
      _
    // Predicated region
    $region14: #{tpu_custom_call.1} parent=1 // pred_check
      _
    $region15: #{tpu_custom_call.1} parent=1 // pred_check_branch
      %43 = sbr.rel (0) target = $region17
    $region16: #{tpu_custom_call.1} parent=1 // pred_region
      %45 = vsyncadd [#allocation6], 0
      %s46 = sshll.u32 %s3, 4
      %s47 = int_to_ptr.hbm [resolvable:$true] %s46
      %s48 = sshll.u32 [#allocation7], 4
      %s49 = int_to_ptr.vmem [resolvable:$true] %s48
      %54 = dma.hbm_to_vmem [thread:$0]  %s47, 1024, %s49, [#allocation6], 64, 64, 4
    $region17: #{tpu_custom_call.1} parent=1 // pred_fallthru
      _
    // Predicated region
    $region18: #{tpu_custom_call.1} parent=1 // pred_check
      _
    $region19: #{tpu_custom_call.1} parent=1 // pred_check_branch
      %56 = sbr.rel (0) target = $region21
    $region20: #{tpu_custom_call.1} parent=1 // pred_region
      _
    $region21: #{tpu_custom_call.1} parent=1 // pred_fallthru
      _
    // Predicated region
    $region22: #{tpu_custom_call.1} parent=1 // pred_check
      _
    $region23: #{tpu_custom_call.1} parent=1 // pred_check_branch
      %58 = sbr.rel (0) target = $region25
    $region24: #{tpu_custom_call.1} parent=1 // pred_region
      %60 = vsyncadd [#allocation9], 0
      %s61 = sshll.u32 %s5, 4
      %s62 = int_to_ptr.hbm [resolvable:$true] %s61
      %s63 = sshll.u32 [#allocation8], 4
      %s64 = int_to_ptr.vmem [resolvable:$true] %s63
      %69 = dma.hbm_to_vmem [thread:$0]  %s62, 1024, %s64, [#allocation9], 64, 64, 4
    $region25: #{tpu_custom_call.1} parent=1 // pred_fallthru
      _
    // Predicated region
    $region26: #{tpu_custom_call.1} parent=1 // pred_check
      _
    $region27: #{tpu_custom_call.1} parent=1 // pred_check_branch
      %71 = sbr.rel (0) target = $region29
    $region28: #{tpu_custom_call.1} parent=1 // pred_region
      _
    $region29: #{tpu_custom_call.1} parent=1 // pred_fallthru
      _
    // Predicated region
    $region30: #{tpu_custom_call.1} parent=1 // pred_check
      _
    $region31: #{tpu_custom_call.1} parent=1 // pred_check_branch
      %73 = sbr.rel (0) target = $region33
    $region32: #{tpu_custom_call.1} parent=1 // pred_region
      %75 = dma.done [#allocation3], 64
    $region33: #{tpu_custom_call.1} parent=1 // pred_fallthru
      _
    // Predicated region
    $region34: #{tpu_custom_call.1} parent=1 // pred_check
      _
    $region35: #{tpu_custom_call.1} parent=1 // pred_check_branch
      %77 = sbr.rel (0) target = $region37
    $region36: #{tpu_custom_call.1} parent=1 // pred_region
      %79 = dma.done [#allocation6], 1024
    $region37: #{tpu_custom_call.1} parent=1 // pred_fallthru
      _
    // Predicated region
    $region38: #{tpu_custom_call.1} parent=1 // pred_check
      _
    $region39: #{tpu_custom_call.1} parent=1 // pred_check_branch
      %81 = sbr.rel (0) target = $region41
    $region40: #{tpu_custom_call.1} parent=1 // pred_region
      %83 = dma.done [#allocation6], 1024
    $region41: #{tpu_custom_call.1} parent=1 // pred_fallthru
      _
    // Predicated region
    $region42: #{tpu_custom_call.1} parent=1 // pred_check
      _
    $region43: #{tpu_custom_call.1} parent=1 // pred_check_branch
      %85 = sbr.rel (0) target = $region45
    $region44: #{tpu_custom_call.1} parent=1 // pred_region
      %87 = dma.done [#allocation9], 1024
    $region45: #{tpu_custom_call.1} parent=1 // pred_fallthru
      _
    %v88 = vld [vmem:[#allocation2] sm:$0xf]
    %v89 = vld [vmem:[#allocation5] sm:$0xf]
    %v90 = vld [vmem:[#allocation5 + $0x4] sm:$0xf]
    %v91 = vld [vmem:[#allocation5 + $0x8] sm:$0xf]
    %v92 = vld [vmem:[#allocation5 + $0xc] sm:$0xf]
    %v93 = vld [vmem:[#allocation5 + $0x10] sm:$0xf]
    %v94 = vld [vmem:[#allocation5 + $0x14] sm:$0xf]
    %v95 = vld [vmem:[#allocation5 + $0x18] sm:$0xf]
    %v96 = vld [vmem:[#allocation5 + $0x1c] sm:$0xf]
    %v97 = vld [vmem:[#allocation5 + $0x20] sm:$0xf]
    %v98 = vld [vmem:[#allocation5 + $0x24] sm:$0xf]
    %v99 = vld [vmem:[#allocation5 + $0x28] sm:$0xf]
    %v100 = vld [vmem:[#allocation5 + $0x2c] sm:$0xf]
    %v101 = vld [vmem:[#allocation5 + $0x30] sm:$0xf]
    %v102 = vld [vmem:[#allocation5 + $0x34] sm:$0xf]
    %v103 = vld [vmem:[#allocation5 + $0x38] sm:$0xf]
    %v104 = vld [vmem:[#allocation5 + $0x3c] sm:$0xf]
    %v105 = vld [vmem:[%s2] sm:$0x1]
    %v107 = vperm.slane %v105, 0
    %v125 = vunpack.c.l.b16 %v89
    %v126 = vunpack.c.l.b16 %v90
    %v127 = vunpack.c.l.b16 %v91
    %v128 = vunpack.c.l.b16 %v92
    %v129 = vunpack.c.l.b16 %v93
    %v130 = vunpack.c.l.b16 %v94
    %v131 = vunpack.c.l.b16 %v95
    %v132 = vunpack.c.l.b16 %v96
    %v133 = vunpack.c.l.b16 %v97
    %v134 = vunpack.c.l.b16 %v98
    %v135 = vunpack.c.l.b16 %v99
    %v136 = vunpack.c.l.b16 %v100
    %v137 = vunpack.c.l.b16 %v101
    %v138 = vunpack.c.l.b16 %v102
    %v139 = vunpack.c.l.b16 %v103
    %v140 = vunpack.c.l.b16 %v104
    %v141 = vpack.c.b16 %v126, %v125
    %v142 = vpack.c.b16 %v128, %v127
    %v143 = vpack.c.b16 %v130, %v129
    %v144 = vpack.c.b16 %v132, %v131
    %v145 = vpack.c.b16 %v134, %v133
    %v146 = vpack.c.b16 %v136, %v135
    %v147 = vpack.c.b16 %v138, %v137
    %v148 = vpack.c.b16 %v140, %v139
    %157 = vmatpush.bf16.msra.mxu0 %v148
    %158 = vmatpush.bf16.msra.mxu0 %v147
    %159 = vmatpush.bf16.msra.mxu0 %v146
    %160 = vmatpush.bf16.msra.mxu0 %v145
    %161 = vmatpush.bf16.msra.mxu0 %v144
    %162 = vmatpush.bf16.msra.mxu0 %v143
    %163 = vmatpush.bf16.msra.mxu0 %v142
    %164 = vmatpush.bf16.msra.mxu0 %v141
    %165 = vmatmul.bf16.gmra.mxu0 %v88
    %v166 = vpop.f32.mrf.mxu0
    %v167 = vadd.f32 %v107, %v166
    %v168 = vpop.f32.mrf.mxu0
    %169 = vdwg.mxu0
    %v170 = vmax.f32 %v167, 0.0
    %v171 = vpack.c.bf16 %v170, %v170
    %v172 = vld [vmem:[#allocation7] sm:$0xf]
    %v173 = vld [vmem:[#allocation7 + $0x4] sm:$0xf]
    %v174 = vld [vmem:[#allocation7 + $0x8] sm:$0xf]
    %v175 = vld [vmem:[#allocation7 + $0xc] sm:$0xf]
    %v176 = vld [vmem:[#allocation7 + $0x10] sm:$0xf]
    %v177 = vld [vmem:[#allocation7 + $0x14] sm:$0xf]
    %v178 = vld [vmem:[#allocation7 + $0x18] sm:$0xf]
    %v179 = vld [vmem:[#allocation7 + $0x1c] sm:$0xf]
    %v180 = vld [vmem:[#allocation7 + $0x20] sm:$0xf]
    %v181 = vld [vmem:[#allocation7 + $0x24] sm:$0xf]
    %v182 = vld [vmem:[#allocation7 + $0x28] sm:$0xf]
    %v183 = vld [vmem:[#allocation7 + $0x2c] sm:$0xf]
    %v184 = vld [vmem:[#allocation7 + $0x30] sm:$0xf]
    %v185 = vld [vmem:[#allocation7 + $0x34] sm:$0xf]
    %v186 = vld [vmem:[#allocation7 + $0x38] sm:$0xf]
    %v187 = vld [vmem:[#allocation7 + $0x3c] sm:$0xf]
    %v188 = vld [vmem:[%s4] sm:$0x1]
    %v190 = vperm.slane %v188, 0
    %v208 = vunpack.c.l.b16 %v172
    %v209 = vunpack.c.l.b16 %v173
    %v210 = vunpack.c.l.b16 %v174
    %v211 = vunpack.c.l.b16 %v175
    %v212 = vunpack.c.l.b16 %v176
    %v213 = vunpack.c.l.b16 %v177
    %v214 = vunpack.c.l.b16 %v178
    %v215 = vunpack.c.l.b16 %v179
    %v216 = vunpack.c.l.b16 %v180
    %v217 = vunpack.c.l.b16 %v181
    %v218 = vunpack.c.l.b16 %v182
    %v219 = vunpack.c.l.b16 %v183
    %v220 = vunpack.c.l.b16 %v184
    %v221 = vunpack.c.l.b16 %v185
    %v222 = vunpack.c.l.b16 %v186
    %v223 = vunpack.c.l.b16 %v187
    %v224 = vpack.c.b16 %v209, %v208
    %v225 = vpack.c.b16 %v211, %v210
    %v226 = vpack.c.b16 %v213, %v212
    %v227 = vpack.c.b16 %v215, %v214
    %v228 = vpack.c.b16 %v217, %v216
    %v229 = vpack.c.b16 %v219, %v218
    %v230 = vpack.c.b16 %v221, %v220
    %v231 = vpack.c.b16 %v223, %v222
    %240 = vmatpush.bf16.msra.mxu0 %v231
    %241 = vmatpush.bf16.msra.mxu0 %v230
    %242 = vmatpush.bf16.msra.mxu0 %v229
    %243 = vmatpush.bf16.msra.mxu0 %v228
    %244 = vmatpush.bf16.msra.mxu0 %v227
    %245 = vmatpush.bf16.msra.mxu0 %v226
    %246 = vmatpush.bf16.msra.mxu0 %v225
    %247 = vmatpush.bf16.msra.mxu0 %v224
    %248 = vmatmul.bf16.gmra.mxu0 %v171
    %v249 = vpop.f32.mrf.mxu0
    %v250 = vadd.f32 %v190, %v249
    %v251 = vpop.f32.mrf.mxu0
    %252 = vdwg.mxu0
    %v253 = vmax.f32 %v250, 0.0
    %v254 = vpack.c.bf16 %v253, %v253
    %v255 = vld [vmem:[#allocation8] sm:$0xf]
    %v256 = vld [vmem:[#allocation8 + $0x4] sm:$0xf]
    %v257 = vld [vmem:[#allocation8 + $0x8] sm:$0xf]
    %v258 = vld [vmem:[#allocation8 + $0xc] sm:$0xf]
    %v259 = vld [vmem:[#allocation8 + $0x10] sm:$0xf]
    %v260 = vld [vmem:[#allocation8 + $0x14] sm:$0xf]
    %v261 = vld [vmem:[#allocation8 + $0x18] sm:$0xf]
    %v262 = vld [vmem:[#allocation8 + $0x1c] sm:$0xf]
    %v263 = vld [vmem:[#allocation8 + $0x20] sm:$0xf]
    %v264 = vld [vmem:[#allocation8 + $0x24] sm:$0xf]
    %v265 = vld [vmem:[#allocation8 + $0x28] sm:$0xf]
    %v266 = vld [vmem:[#allocation8 + $0x2c] sm:$0xf]
    %v267 = vld [vmem:[#allocation8 + $0x30] sm:$0xf]
    %v268 = vld [vmem:[#allocation8 + $0x34] sm:$0xf]
    %v269 = vld [vmem:[#allocation8 + $0x38] sm:$0xf]
    %v270 = vld [vmem:[#allocation8 + $0x3c] sm:$0xf]
    %v271 = vld [vmem:[%s6] sm:$0x1]
    %v273 = vperm.slane %v271, 0
    %v291 = vunpack.c.l.b16 %v255
    %v292 = vunpack.c.l.b16 %v256
    %v293 = vunpack.c.l.b16 %v257
    %v294 = vunpack.c.l.b16 %v258
    %v295 = vunpack.c.l.b16 %v259
    %v296 = vunpack.c.l.b16 %v260
    %v297 = vunpack.c.l.b16 %v261
    %v298 = vunpack.c.l.b16 %v262
    %v299 = vunpack.c.l.b16 %v263
    %v300 = vunpack.c.l.b16 %v264
    %v301 = vunpack.c.l.b16 %v265
    %v302 = vunpack.c.l.b16 %v266
    %v303 = vunpack.c.l.b16 %v267
    %v304 = vunpack.c.l.b16 %v268
    %v305 = vunpack.c.l.b16 %v269
    %v306 = vunpack.c.l.b16 %v270
    %v307 = vpack.c.b16 %v292, %v291
    %v308 = vpack.c.b16 %v294, %v293
    %v309 = vpack.c.b16 %v296, %v295
    %v310 = vpack.c.b16 %v298, %v297
    %v311 = vpack.c.b16 %v300, %v299
    %v312 = vpack.c.b16 %v302, %v301
    %v313 = vpack.c.b16 %v304, %v303
    %v314 = vpack.c.b16 %v306, %v305
    %323 = vmatpush.bf16.msra.mxu0 %v314
    %324 = vmatpush.bf16.msra.mxu0 %v313
    %325 = vmatpush.bf16.msra.mxu0 %v312
    %326 = vmatpush.bf16.msra.mxu0 %v311
    %327 = vmatpush.bf16.msra.mxu0 %v310
    %328 = vmatpush.bf16.msra.mxu0 %v309
    %329 = vmatpush.bf16.msra.mxu0 %v308
    %330 = vmatpush.bf16.msra.mxu0 %v307
    %331 = vmatmul.bf16.gmra.mxu0 %v254
    %v332 = vpop.f32.mrf.mxu0
    %v333 = vadd.f32 %v273, %v332
    %v334 = vpop.f32.mrf.mxu0
    %335 = vdwg.mxu0
    %336 = vst [vmem:[#allocation10] sm:$0xff] %v333
    // Predicated region
    $region46: #{tpu_custom_call.1} parent=1 // pred_check
      _
    $region47: #{tpu_custom_call.1} parent=1 // pred_check_branch
      %338 = sbr.rel (0) target = $region49
    $region48: #{tpu_custom_call.1} parent=1 // pred_region
      %340 = vsyncadd [#allocation4], 0
      %s342 = sshll.u32 [#allocation10], 4
      %s343 = int_to_ptr.vmem [resolvable:$true] %s342
      %s344 = sshll.u32 %s7, 4
      %s345 = int_to_ptr.hbm [resolvable:$true] %s344
      %347 = dma.vmem_to_hbm [thread:$0]  %s343, 128, %s345, [#allocation4]
    $region49: #{tpu_custom_call.1} parent=1 // pred_fallthru
      _
    // Predicated region
    $region50: #{tpu_custom_call.1} parent=1 // pred_check
      _
    $region51: #{tpu_custom_call.1} parent=1 // pred_check_branch
      %349 = sbr.rel (0) target = $region53
    $region52: #{tpu_custom_call.1} parent=1 // pred_region
      %351 = dma.done [#allocation4], 128
    $region53: #{tpu_custom_call.1} parent=1 // pred_fallthru
      _
    %352 = vsyncpa [#allocation3], 1
    %353 = vsyncpa [#allocation6], 1
    %354 = vsyncpa [#allocation9], 1
    %355 = vsyncpa [#allocation4], 1

</llo_original>
